<compile_context>
chip_gen: v7x
topology: tpu7x:2x2x1
jax: 0.10.0
libtpu: 0.0.40
codegen_flags: <defaults>
</compile_context>

<pallas_src>
import functools

import jax
import jax.numpy as jnp
from jax.experimental import pallas as pl
from jax.experimental.pallas import tpu as pltpu


# ---------------------------------------------------------------------------
# Kernel 1: global average pool over the flattened spatial axis.
#   x3: (b_p, c, hw_p) -> pooled: (b_p, c) float32
# Grid = (batch_blocks, channel_blocks, hw_blocks); hw is the innermost
# ("arbitrary") reduction axis, batch/channel axes are "parallel".
# ---------------------------------------------------------------------------
def _pool_kernel(x_ref, out_ref, acc_ref, *, inv_hw):
    k = pl.program_id(2)

    @pl.when(k == 0)
    def _init():
        acc_ref[...] = jnp.zeros_like(acc_ref)

    # Reduce the tile immediately: VPU/XLU adds into a tiny (b_tile, c_tile)
    # f32 accumulator -> steady state is one vld per x vreg (HBM-bound).
    acc_ref[...] += jnp.sum(x_ref[...].astype(jnp.float32), axis=-1)

    @pl.when(k == pl.num_programs(2) - 1)
    def _finalize():
        # Zero-padding of hw never changes the sum; divide by the true h*w.
        out_ref[...] = acc_ref[...] * inv_hw


# ---------------------------------------------------------------------------
# Kernel 2: per-row MLP  out = GELU(pooled @ WdT + bd) @ WuT + bu
# Grid = (hidden_blocks,): weights are streamed block-by-block along the
# hidden (ratio*c) dimension; output accumulated in a (b, c) f32 scratch.
# ---------------------------------------------------------------------------
def _mlp_kernel(pooled_ref, wdT_ref, bd_ref, wuT_ref, bu_ref, out_ref, acc_ref):
    j = pl.program_id(0)

    @pl.when(j == 0)
    def _init():
        acc_ref[...] = jnp.zeros_like(acc_ref)

    hidden = jnp.dot(pooled_ref[...], wdT_ref[...],
                     preferred_element_type=jnp.float32) + bd_ref[...]
    hidden = jax.nn.gelu(hidden, approximate=False)          # exact (erf) GELU
    acc_ref[...] += jnp.dot(hidden, wuT_ref[...],
                            preferred_element_type=jnp.float32)

    @pl.when(j == pl.num_programs(0) - 1)
    def _finalize():
        out_ref[...] = (acc_ref[...] + bu_ref[...]).astype(out_ref.dtype)


def _vmem_ceiling_bytes():
    """~75% of physical VMEM (48 MiB on v7x, 96 MiB on v5e/v6e)."""
    try:
        cap = int(pltpu.get_tpu_info().vmem_capacity_bytes)
    except Exception:
        cap = 64 * 1024 * 1024
    return (cap * 3) // 4


def feature_pool(x, w_down, b_down, w_up, b_up, *, tile_budget_bytes=8 << 20):
    b, c, h, w = x.shape
    hw = h * w
    c2 = w_down.shape[0]                       # = ratio * c
    itemsize = x.dtype.itemsize
    vmem_ceiling = _vmem_ceiling_bytes()

    # ---- wrapper-side layout plumbing (cheap XLA ops) ----------------------
    x3 = x.reshape(b, c, hw)                               # contiguous NCHW -> free
    wdT = jnp.asarray(w_down).T.astype(jnp.float32)        # (c, c2)
    wuT = jnp.asarray(w_up).T.astype(jnp.float32)          # (c2, c)
    bd2 = jnp.asarray(b_down).reshape(1, c2).astype(jnp.float32)
    bu2 = jnp.asarray(b_up).reshape(1, c).astype(jnp.float32)

    # ---- batch tiling: fixed sublane-aligned tile, pad the remainder -------
    if b >= 8:
        b_tile = 8
        b_pad = (-b) % 8
    else:
        b_tile = b                                         # full-dim block exception
        b_pad = 0
    b_p = b + b_pad

    # ---- channel tile (only split when even a 128-lane tile blows budget) --
    if (tile_budget_bytes // (b_tile * c * itemsize) >= 128) or (c % 128 != 0):
        c_tile = c
    else:
        c_tile = (tile_budget_bytes // (b_tile * 128 * itemsize)) // 128 * 128
        c_tile = max(128, min(c_tile, c))
        while c % c_tile != 0:                             # c % 128 == 0 here
            c_tile -= 128

    # ---- hw tile: as large as the budget allows (full hw if it fits) -------
    allowed_lanes = max(
        128, (tile_budget_bytes // (b_tile * c_tile * itemsize)) // 128 * 128)
    hw_128 = -(-hw // 128) * 128
    hw_tile = hw_128 if hw_128 <= allowed_lanes else allowed_lanes
    hw_p = -(-hw // hw_tile) * hw_tile
    hw_pad = hw_p - hw

    if b_pad or hw_pad:
        # zero padding never changes the sum; we divide by the true h*w
        x3 = jnp.pad(x3, ((0, b_pad), (0, 0), (0, hw_pad)))

    grid = (b_p // b_tile, c // c_tile, hw_p // hw_tile)

    # ---- pooling pallas_call ------------------------------------------------
    pool_est_vmem = (2 * b_tile * c_tile * hw_tile * itemsize   # dbl-buffered x
                     + b_tile * c_tile * 4                      # accumulator
                     + 2 * b_tile * c_tile * 4)                 # output blocks
    pool_vmem = int(min(max(2 * pool_est_vmem, 16 << 20), vmem_ceiling))
    pool_cost = pl.CostEstimate(
        flops=int(b_p * c * hw_p),
        transcendentals=0,
        bytes_accessed=int(b_p * c * hw_p * itemsize + b_p * c * 4),
    )

    pooled = pl.pallas_call(
        functools.partial(_pool_kernel, inv_hw=1.0 / float(hw)),
        out_shape=jax.ShapeDtypeStruct((b_p, c), jnp.float32),
        grid_spec=pltpu.PrefetchScalarGridSpec(
            num_scalar_prefetch=0,
            grid=grid,
            in_specs=[pl.BlockSpec((b_tile, c_tile, hw_tile),
                                   lambda i, jc, k: (i, jc, k))],
            out_specs=pl.BlockSpec((b_tile, c_tile), lambda i, jc, k: (i, jc)),
            scratch_shapes=[pltpu.VMEM((b_tile, c_tile), jnp.float32)],
        ),
        compiler_params=pltpu.CompilerParams(
            dimension_semantics=("parallel", "parallel", "arbitrary"),
            vmem_limit_bytes=pool_vmem,
        ),
        cost_estimate=pool_cost,
    )(x3)

    if b_pad:
        pooled = pooled[:b]                                # drop padded rows

    # ---- MLP pallas_call: one pass over all batch rows, weights streamed ---
    if c2 % 128 == 0 and c2 > 512:
        c2_tile = 512
        while c2 % c2_tile != 0:
            c2_tile -= 128
    else:
        c2_tile = c2

    mlp_est_vmem = (2 * (c * c2_tile + c2_tile * c + c2_tile + c) * 4
                    + 3 * b * c * 4)
    mlp_vmem = int(min(max(2 * mlp_est_vmem, 16 << 20), vmem_ceiling))
    mlp_cost = pl.CostEstimate(
        flops=int(4 * b * c * c2),
        transcendentals=int(b * c2),
        bytes_accessed=int((2 * c * c2 + c2 + c) * 4 + b * c * 4
                           + b * c * itemsize),
    )

    out = pl.pallas_call(
        _mlp_kernel,
        out_shape=jax.ShapeDtypeStruct((b, c), x.dtype),
        grid_spec=pltpu.PrefetchScalarGridSpec(
            num_scalar_prefetch=0,
            grid=(c2 // c2_tile,),
            in_specs=[
                pl.BlockSpec((b, c), lambda j: (0, 0)),          # pooled (resident)
                pl.BlockSpec((c, c2_tile), lambda j: (0, j)),    # W_down^T block
                pl.BlockSpec((1, c2_tile), lambda j: (0, j)),    # b_down block
                pl.BlockSpec((c2_tile, c), lambda j: (j, 0)),    # W_up^T block
                pl.BlockSpec((1, c), lambda j: (0, 0)),          # b_up
            ],
            out_specs=pl.BlockSpec((b, c), lambda j: (0, 0)),
            scratch_shapes=[pltpu.VMEM((b, c), jnp.float32)],
        ),
        compiler_params=pltpu.CompilerParams(
            dimension_semantics=("arbitrary",),
            vmem_limit_bytes=mlp_vmem,
        ),
        cost_estimate=mlp_cost,
    )(pooled, wdT, bd2, wuT, bu2)

    return out


def _reference(x, w_down, b_down, w_up, b_up):
    pooled = jnp.mean(x.astype(jnp.float32), axis=(2, 3))            # (b, c)
    hid = jax.nn.gelu(pooled @ w_down.T + b_down, approximate=False)
    return (hid @ w_up.T + b_up).astype(x.dtype)                     # (b, c)


if __name__ == "__main__":
    key = jax.random.PRNGKey(0)
    b, c, h, w = 2, 4, 16, 16
    ratio = 2

    k_x, k_wd, k_bd, k_wu, k_bu = jax.random.split(key, 5)
    x = jax.random.normal(k_x, (b, c, h, w), dtype=jnp.float32)
    # PyTorch Linear weight convention: W_down (2c, c), W_up (c, 2c), y = x @ W.T + b
    w_down = jax.random.normal(k_wd, (c * ratio, c), dtype=jnp.float32) * 0.1
    b_down = jax.random.normal(k_bd, (c * ratio,), dtype=jnp.float32) * 0.1
    w_up = jax.random.normal(k_wu, (c, c * ratio), dtype=jnp.float32) * 0.1
    b_up = jax.random.normal(k_bu, (c,), dtype=jnp.float32) * 0.1

    y = feature_pool(x, w_down, b_down, w_up, b_up)
    jax.block_until_ready(y)

    y_ref = _reference(x, w_down, b_down, w_up, b_up)
    assert y.shape == (b, c)
    assert jnp.allclose(y, y_ref, atol=1e-5, rtol=1e-5)

    print("KERNEL_OK")
</pallas_src>

<mosaic_0001>
module attributes {stable_mosaic.version = 11 : i64} {
  func.func @_pool_kernel(%arg0: i32, %arg1: i32, %arg2: i32, %arg3: memref<2x4x256xf32, #tpu.memory_space<vmem>>, %arg4: memref<2x4xf32, #tpu.memory_space<vmem>>, %arg5: memref<2x4xf32, #tpu.memory_space<vmem>>) attributes {dimension_semantics = [#tpu.dimension_semantics<parallel>, #tpu.dimension_semantics<parallel>, #tpu.dimension_semantics<arbitrary>], iteration_bounds = array<i64: 1, 1, 1>, scalar_prefetch = 0 : i64, scratch_operands = 1 : i64, tpu.core_type = #tpu.core_type<tc>, window_params = [{transform_indices = @transform_0, window_bounds = array<i64: 2, 4, 256>}, {transform_indices = @transform_1, window_bounds = array<i64: 2, 4>}]} {
    %c0_i32 = arith.constant 0 : i32
    %0 = arith.cmpi eq, %arg2, %c0_i32 : i32
    %1 = arith.extui %0 : i1 to i32
    %c0_i32_0 = arith.constant 0 : i32
    %2 = arith.cmpi ne, %1, %c0_i32_0 : i32
    scf.if %2 {
      %cst_9 = arith.constant 0.000000e+00 : f32
      %11 = vector.broadcast %cst_9 : f32 to vector<2x4xf32>
      %c0_10 = arith.constant 0 : index
      %c0_11 = arith.constant 0 : index
      %12 = vector.load %arg5[%c0_10, %c0_11] : memref<2x4xf32, #tpu.memory_space<vmem>>, vector<2x4xf32>
      tpu.vector_store %arg5[%c0_10, %c0_11], %11 {strides = array<i32>} : memref<2x4xf32, #tpu.memory_space<vmem>>, vector<2x4xf32>,
    } else {
    }
    %c0 = arith.constant 0 : index
    %c0_1 = arith.constant 0 : index
    %3 = vector.load %arg5[%c0, %c0_1] : memref<2x4xf32, #tpu.memory_space<vmem>>, vector<2x4xf32>
    %c0_2 = arith.constant 0 : index
    %c0_3 = arith.constant 0 : index
    %c0_4 = arith.constant 0 : index
    %4 = vector.load %arg3[%c0_2, %c0_3, %c0_4] : memref<2x4x256xf32, #tpu.memory_space<vmem>>, vector<2x4x256xf32>
    %cst = arith.constant dense<0.000000e+00> : vector<2x4xf32>
    %5 = vector.multi_reduction <add>, %4, %cst [2] : vector<2x4x256xf32> to vector<2x4xf32>
    %6 = arith.addf %3, %5 : vector<2x4xf32>
    %c0_5 = arith.constant 0 : index
    %c0_6 = arith.constant 0 : index
    %7 = vector.load %arg5[%c0_5, %c0_6] : memref<2x4xf32, #tpu.memory_space<vmem>>, vector<2x4xf32>
    tpu.vector_store %arg5[%c0_5, %c0_6], %6 {strides = array<i32>} : memref<2x4xf32, #tpu.memory_space<vmem>>, vector<2x4xf32>,
    %c0_i32_7 = arith.constant 0 : i32
    %8 = arith.cmpi eq, %arg2, %c0_i32_7 : i32
    %9 = arith.extui %8 : i1 to i32
    %c0_i32_8 = arith.constant 0 : i32
    %10 = arith.cmpi ne, %9, %c0_i32_8 : i32
    scf.if %10 {
      %c0_9 = arith.constant 0 : index
      %c0_10 = arith.constant 0 : index
      %11 = vector.load %arg5[%c0_9, %c0_10] : memref<2x4xf32, #tpu.memory_space<vmem>>, vector<2x4xf32>
      %cst_11 = arith.constant 3.906250e-03 : f32
      %12 = vector.broadcast %cst_11 : f32 to vector<2x4xf32>
      %13 = arith.mulf %11, %12 : vector<2x4xf32>
      %c0_12 = arith.constant 0 : index
      %c0_13 = arith.constant 0 : index
      %14 = vector.load %arg4[%c0_12, %c0_13] : memref<2x4xf32, #tpu.memory_space<vmem>>, vector<2x4xf32>
      tpu.vector_store %arg4[%c0_12, %c0_13], %13 {strides = array<i32>} : memref<2x4xf32, #tpu.memory_space<vmem>>, vector<2x4xf32>,
    } else {
    }
    return
  }
  func.func @transform_0(%arg0: i32, %arg1: i32, %arg2: i32) -> (i32, i32, i32) {
    %c0_i32 = arith.constant 0 : i32
    return %arg0, %arg1, %arg2 : i32, i32, i32
  }
  func.func @transform_1(%arg0: i32, %arg1: i32, %arg2: i32) -> (i32, i32) {
    %c0_i32 = arith.constant 0 : i32
    return %arg0, %arg1 : i32, i32
  }
}

</mosaic_0001>

<llo_original>
// kernel: tpu_custom_call.1
$region0: #{tpu_custom_call.1}
  #allocation0 [shape = 'u32[]', space=smem, size = 0x4, offset = 0x4, fixed_abs, tag = 'smem constant byte address 0x4 - core index']
  #allocation1 [shape = 'u32[144,128]{1,0:T(1,128)}', space=vmem, size = 0x12000, scoped, tag = 'internal scratch']
  #allocation2 [shape = 'f32[2,4]{1,0:T(2,128)}', space=vmem, size = 0x400, scoped, tag = 'scratch operand']
  %s0 = inlined_call_operand.hbm [shape: f32[2,4,256], index: 0, kind: input, shape index: {}]
  %s1 = inlined_call_operand.hbm [shape: f32[2,4], index: 1, kind: output, shape index: {}]
  %s2 = sld [smem:[#allocation0]]
  $region26: #{tpu_custom_call.1} parent=0
    _
  %s4 = ssub.s32 1, %s2
  %s5 = scalar_select 0, %s4, %s2
  $region1: #{tpu_custom_call.1} parent=0
    #allocation3 [shape = 'u8[8192]{0}', space=vmem, size = 0x2000, scoped, tag = 'input window, operand 0, single buffered']
    #allocation4 [shape = 's32[1]{0}', space=sflag, size = 0x4, scoped, tag = 'scoped memory for tpu_custom_call.1']
    #allocation5 [shape = 's32[1]{0}', space=sflag, size = 0x4, scoped, tag = 'scoped memory for tpu_custom_call.1']
    #allocation6 [shape = 'u8[1024]{0}', space=vmem, size = 0x400, scoped, tag = 'output window, operand 0, single buffered']
    %6 = vsyncpa [#allocation4], 0
    %7 = vsyncpa [#allocation5], 0
    // Predicated region
    $region2: #{tpu_custom_call.1} parent=1 // pred_check
      _
    $region3: #{tpu_custom_call.1} parent=1 // pred_check_branch
      %9 = sbr.rel (0) target = $region5
    $region4: #{tpu_custom_call.1} parent=1 // pred_region
      %s11 = ssub.s32 256, 256
      %12 = vsyncadd [#allocation4], %s11
      %s13 = sshll.u32 [#allocation3], 4
      %s14 = int_to_ptr.vmem [resolvable:$true] %s13
      %19 = dma.hbm_to_vmem [thread:$0]  %s0, 256, %s14, [#allocation4], 128, 128, 8
    $region5: #{tpu_custom_call.1} parent=1 // pred_fallthru
      _
    // Predicated region
    $region6: #{tpu_custom_call.1} parent=1 // pred_check
      _
    $region7: #{tpu_custom_call.1} parent=1 // pred_check_branch
      %21 = sbr.rel (0) target = $region9
    $region8: #{tpu_custom_call.1} parent=1 // pred_region
      %22 = dma.done [#allocation4], 256
    $region9: #{tpu_custom_call.1} parent=1 // pred_fallthru
      _
    %p23 = scmp.eq.s32.totalorder 0, 0
    // Predicated region
    $region10: #{tpu_custom_call.1} parent=1 // pred_check
      %p24 = pneg %p23
    $region11: #{tpu_custom_call.1} parent=1 // pred_check_branch
      %26 = sbr.rel (%p24) target = $region13
    $region12: #{tpu_custom_call.1} parent=1 // pred_region
      %vm27 = vcmask 25600
      %28 = vst.msk [vmem:[#allocation2] sm:$0x3] %vm27, 0.0
    $region13: #{tpu_custom_call.1} parent=1 // pred_fallthru
      _
    %v29 = vld [vmem:[#allocation2] sm:$0x3]
    %v30 = vld [vmem:[#allocation3] sm:$0xff]
    %v31 = vld [vmem:[#allocation3 + $0x8] sm:$0xff]
    %v34 = vcombine.high %v30, %v30
    %v35 = vcombine.high %v31, %v31
    %vm38 = vcmask 1043456
    %v39 = vsel %vm38, %v30, 0.0
    %v40 = vsel %vm38, %v34, 0.0
    %v41 = vadd.f32 %v39, %v40
    %42 = vadd.xlane.f32.xlu0 %v41
    %v43 = vpop.xlane.xlu0 %42
    %v44 = vsel %vm38, %v31, 0.0
    %v45 = vsel %vm38, %v35, 0.0
    %v46 = vadd.f32 %v44, %v45
    %47 = vadd.xlane.f32.xlu0 %v46
    %v48 = vpop.xlane.xlu0 %47
    %v51 = vlaneseq
    %v52 = vand.u32 %v51, 127
    %v53 = vlaneseq
    %v54 = vshrl.u32 %v53, 7
    %v55 = vsub.s32 %v52, %v54
    %v56 = vrot.slane %v43, %v55
    %v57 = vlaneseq
    %v58 = vshrl.u32 %v57, 7
    %v59 = vsub.s32 %v52, %v58
    %v60 = vrot.slane %v48, %v59
    %vm61 = vcmask 1041409
    %v62 = vsel %vm61, %v60, %v56
    %v64 = vadd.f32 %v29, %v62
    %vm65 = vcmask 25600
    %66 = vst.msk [vmem:[#allocation2] sm:$0x3] %vm65, %v64
    // Predicated region
    $region14: #{tpu_custom_call.1} parent=1 // pred_check
      %p67 = pneg %p23
    $region15: #{tpu_custom_call.1} parent=1 // pred_check_branch
      %69 = sbr.rel (%p67) target = $region17
    $region16: #{tpu_custom_call.1} parent=1 // pred_region
      %v70 = vld [vmem:[#allocation2] sm:$0x3]
      %v71 = vmul.f32 %v70, 0.00390625
      %72 = vst.msk [vmem:[#allocation6] sm:$0x3] %vm65, %v71
    $region17: #{tpu_custom_call.1} parent=1 // pred_fallthru
      _
    // Predicated region
    $region18: #{tpu_custom_call.1} parent=1 // pred_check
      _
    $region19: #{tpu_custom_call.1} parent=1 // pred_check_branch
      %74 = sbr.rel (0) target = $region21
    $region20: #{tpu_custom_call.1} parent=1 // pred_region
      %s76 = ssub.s32 32, 32
      %77 = vsyncadd [#allocation5], %s76
      %s79 = sshll.u32 [#allocation6], 4
      %s80 = int_to_ptr.vmem [resolvable:$true] %s79
      %82 = dma.vmem_to_hbm [thread:$0]  %s80, 32, %s1, [#allocation5]
    $region21: #{tpu_custom_call.1} parent=1 // pred_fallthru
      _
    // Predicated region
    $region22: #{tpu_custom_call.1} parent=1 // pred_check
      _
    $region23: #{tpu_custom_call.1} parent=1 // pred_check_branch
      %84 = sbr.rel (0) target = $region25
    $region24: #{tpu_custom_call.1} parent=1 // pred_region
      %85 = dma.done [#allocation5], 32
    $region25: #{tpu_custom_call.1} parent=1 // pred_fallthru
      _
    %86 = vsyncpa [#allocation4], 1
    %87 = vsyncpa [#allocation5], 1

</llo_original>
